<compile_context>
chip_gen: v7x
topology: tpu7x:2x2x1
jax: 0.10.0
libtpu: 0.0.40
codegen_flags: <defaults>
</compile_context>

<pallas_src>
import jax
import jax.numpy as jnp
from jax.experimental import pallas as pl
from jax.experimental.pallas import tpu as pltpu


def _round_up(x: int, m: int) -> int:
    return ((x + m - 1) // m) * m


def _encoder_kernel(label_ref, feat_ref, w_ref, b_ref, out_ref):
    """One row-tile of: out = concat(L, X) @ W + b (single fused MXU matmul)."""
    x = jnp.concatenate([label_ref[...], feat_ref[...]], axis=-1)  # (tile_n, K)
    acc = jnp.dot(x, w_ref[...], preferred_element_type=jnp.float32)
    # bias is (1, out_pad) f32, broadcasts over rows; keep the add in f32.
    out_ref[...] = (acc + b_ref[...]).astype(out_ref.dtype)


def base_encoder_forward(label_matrix, features, w_lf, w_ft, b, *, tile_n=512):
    """Pallas wrapper: (n, num_LFs), (n, feat_dim) -> (n, output_dim) f32."""
    n, num_lfs = label_matrix.shape
    _, feat_dim = features.shape
    output_dim = w_lf.shape[1]
    k_total = num_lfs + feat_dim

    # --- tile selection -----------------------------------------------------
    # Cap the tile so the grid has at least 2 steps when n permits (v7x has two
    # TensorCores per chip; a 1-step grid would leave half the chip idle).
    tile_n = max(8, min(tile_n, _round_up(pl.cdiv(n, 2), 8)))
    n_pad = _round_up(n, tile_n)
    grid = (n_pad // tile_n,)

    # Lane-dense output: pad output_dim to a multiple of 128 (unmasked stores).
    out_pad = _round_up(output_dim, 128)

    # --- operand prep (bf16 matmul operands, fused + padded weights) --------
    lm = label_matrix.astype(jnp.bfloat16)
    ft = features.astype(jnp.bfloat16)
    if n_pad != n:
        lm = jnp.pad(lm, ((0, n_pad - n), (0, 0)))
        ft = jnp.pad(ft, ((0, n_pad - n), (0, 0)))

    w_all = jnp.concatenate([w_lf, w_ft], axis=0).astype(jnp.bfloat16)
    if out_pad != output_dim:
        w_all = jnp.pad(w_all, ((0, 0), (0, out_pad - output_dim)))
        b_pad = jnp.pad(b.astype(jnp.float32),
                        ((0, 0), (0, out_pad - output_dim)))
    else:
        b_pad = b.astype(jnp.float32)

    # --- VMEM budget (sized against v7x's 64 MiB physical / 32 MiB scoped) --
    bytes_needed = (
        2 * 2 * tile_n * k_total * 2        # two bf16 input streams, 2 buffers
        + 2 * tile_n * out_pad * 4          # f32 output, 2 buffers
        + 2 * k_total * out_pad * 2         # resident bf16 weights (2 buffers)
        + 2 * out_pad * 4                   # bias
        + (1 << 20)                         # slack
    )
    vmem_limit = min(max(2 * bytes_needed, 8 << 20), 32 << 20)

    cost = pl.CostEstimate(
        flops=2 * n_pad * k_total * out_pad,
        transcendentals=0,
        bytes_accessed=(n_pad * k_total * 2          # inputs (bf16)
                        + k_total * out_pad * 2      # weights (bf16)
                        + out_pad * 4                # bias
                        + n_pad * out_pad * 4),      # output (f32)
    )

    out = pl.pallas_call(
        _encoder_kernel,
        out_shape=jax.ShapeDtypeStruct((n_pad, out_pad), jnp.float32),
        grid_spec=pl.GridSpec(
            grid=grid,
            in_specs=[
                # row-tile of the LF votes
                pl.BlockSpec((tile_n, num_lfs), lambda i: (i, 0)),
                # row-tile of the aux features
                pl.BlockSpec((tile_n, feat_dim), lambda i: (i, 0)),
                # fused weight matrix + bias, resident across the grid
                pl.BlockSpec((k_total, out_pad), lambda i: (0, 0)),
                pl.BlockSpec((1, out_pad), lambda i: (0, 0)),
            ],
            out_specs=pl.BlockSpec((tile_n, out_pad), lambda i: (i, 0)),
        ),
        compiler_params=pltpu.CompilerParams(
            dimension_semantics=("parallel",),
            vmem_limit_bytes=vmem_limit),
        cost_estimate=cost,
    )(lm, ft, w_all, b_pad)

    # Strip row padding and output-lane padding.
    return out[:n, :output_dim]


if __name__ == "__main__":
    # Small, deterministic shapes consistent with the module's contract.
    n = 512          # number of examples (padded/tiled internally)
    num_LFs = 8      # m labeling functions
    feat_dim = 32    # auxiliary feature dim (example_extra_input)
    output_dim = 32  # self.output_dim

    key = jax.random.PRNGKey(0)
    k1, k2, k3, k4, k5 = jax.random.split(key, 5)

    # LF votes (typically in {-1, 0, 1}); exact in bf16.
    label_matrix = jax.random.randint(
        k1, (n, num_LFs), minval=-1, maxval=2).astype(jnp.float32)
    features = jax.random.normal(k2, (n, feat_dim), dtype=jnp.float32)

    # Deterministic synthetic parameters (module __init__ defines only dims).
    w_lf = 0.1 * jax.random.normal(k3, (num_LFs, output_dim), dtype=jnp.float32)
    w_ft = 0.1 * jax.random.normal(k4, (feat_dim, output_dim), dtype=jnp.float32)
    b = 0.01 * jax.random.normal(k5, (1, output_dim), dtype=jnp.float32)

    out = base_encoder_forward(label_matrix, features, w_lf, w_ft, b)
    out = jax.block_until_ready(out)

    # Reference with the same bf16 operand casts (f32 accumulate) as the kernel.
    lm_bf = label_matrix.astype(jnp.bfloat16)
    ft_bf = features.astype(jnp.bfloat16)
    ref = (jnp.dot(lm_bf, w_lf.astype(jnp.bfloat16),
                   preferred_element_type=jnp.float32)
           + jnp.dot(ft_bf, w_ft.astype(jnp.bfloat16),
                     preferred_element_type=jnp.float32)
           + b.astype(jnp.float32))

    assert out.shape == (n, output_dim)
    assert jnp.allclose(out, ref, atol=1e-2, rtol=1e-2)

    print("KERNEL_OK")
</pallas_src>

<mosaic_0001>
module attributes {stable_mosaic.version = 11 : i64} {
  func.func @_encoder_kernel(%arg0: i32, %arg1: memref<256x8xbf16, #tpu.memory_space<vmem>>, %arg2: memref<256x32xbf16, #tpu.memory_space<vmem>>, %arg3: memref<40x128xbf16, #tpu.memory_space<vmem>>, %arg4: memref<1x128xf32, #tpu.memory_space<vmem>>, %arg5: memref<256x128xf32, #tpu.memory_space<vmem>>) attributes {dimension_semantics = [#tpu.dimension_semantics<parallel>], iteration_bounds = array<i64: 2>, scalar_prefetch = 0 : i64, scratch_operands = 0 : i64, tpu.core_type = #tpu.core_type<tc>, window_params = [{transform_indices = @transform_0, window_bounds = array<i64: 256, 8>}, {transform_indices = @transform_1, window_bounds = array<i64: 256, 32>}, {pipeline_mode = #tpu.pipeline_mode<synchronous>, transform_indices = @transform_2, window_bounds = array<i64: 40, 128>}, {pipeline_mode = #tpu.pipeline_mode<synchronous>, transform_indices = @transform_3, window_bounds = array<i64: 1, 128>}, {transform_indices = @transform_4, window_bounds = array<i64: 256, 128>}]} {
    %c0 = arith.constant 0 : index
    %c0_0 = arith.constant 0 : index
    %0 = vector.load %arg1[%c0, %c0_0] : memref<256x8xbf16, #tpu.memory_space<vmem>>, vector<256x8xbf16>
    %c0_1 = arith.constant 0 : index
    %c0_2 = arith.constant 0 : index
    %1 = vector.load %arg2[%c0_1, %c0_2] : memref<256x32xbf16, #tpu.memory_space<vmem>>, vector<256x32xbf16>
    %2 = tpu.concatenate %0, %1 in 1 : vector<256x8xbf16>, vector<256x32xbf16> -> vector<256x40xbf16>
    %c0_3 = arith.constant 0 : index
    %c0_4 = arith.constant 0 : index
    %3 = vector.load %arg3[%c0_3, %c0_4] : memref<40x128xbf16, #tpu.memory_space<vmem>>, vector<40x128xbf16>
    %cst = arith.constant dense<0.000000e+00> : vector<256x128xf32>
    %4 = tpu.matmul %2, %3, %cst {dimension_numbers = #tpu.dot_dimension_numbers<[1], [0], [0], [1], [0, 0, 1, 1], [], []>} : vector<256x40xbf16>, vector<40x128xbf16>, vector<256x128xf32> -> vector<256x128xf32>
    %c0_5 = arith.constant 0 : index
    %c0_6 = arith.constant 0 : index
    %5 = vector.load %arg4[%c0_5, %c0_6] : memref<1x128xf32, #tpu.memory_space<vmem>>, vector<1x128xf32>
    %6 = vector.broadcast %5 : vector<1x128xf32> to vector<256x128xf32>
    %7 = arith.addf %4, %6 : vector<256x128xf32>
    %c0_7 = arith.constant 0 : index
    %c0_8 = arith.constant 0 : index
    %8 = vector.load %arg5[%c0_7, %c0_8] : memref<256x128xf32, #tpu.memory_space<vmem>>, vector<256x128xf32>
    tpu.vector_store %arg5[%c0_7, %c0_8], %7 {strides = array<i32>} : memref<256x128xf32, #tpu.memory_space<vmem>>, vector<256x128xf32>,
    return
  }
  func.func @transform_0(%arg0: i32) -> (i32, i32) {
    %c0_i32 = arith.constant 0 : i32
    %c0_i32_0 = arith.constant 0 : i32
    return %arg0, %c0_i32 : i32, i32
  }
  func.func @transform_1(%arg0: i32) -> (i32, i32) {
    %c0_i32 = arith.constant 0 : i32
    %c0_i32_0 = arith.constant 0 : i32
    return %arg0, %c0_i32 : i32, i32
  }
  func.func @transform_2(%arg0: i32) -> (i32, i32) {
    %c0_i32 = arith.constant 0 : i32
    %c0_i32_0 = arith.constant 0 : i32
    %c0_i32_1 = arith.constant 0 : i32
    return %c0_i32, %c0_i32_0 : i32, i32
  }
  func.func @transform_3(%arg0: i32) -> (i32, i32) {
    %c0_i32 = arith.constant 0 : i32
    %c0_i32_0 = arith.constant 0 : i32
    %c0_i32_1 = arith.constant 0 : i32
    return %c0_i32, %c0_i32_0 : i32, i32
  }
  func.func @transform_4(%arg0: i32) -> (i32, i32) {
    %c0_i32 = arith.constant 0 : i32
    %c0_i32_0 = arith.constant 0 : i32
    return %arg0, %c0_i32 : i32, i32
  }
}

</mosaic_0001>

<llo_original>
// kernel: tpu_custom_call.1
$region0: #{tpu_custom_call.1}
  #allocation0 [shape = 'u32[]', space=smem, size = 0x4, offset = 0x4, fixed_abs, tag = 'smem constant byte address 0x4 - core index']
  #allocation1 [shape = 'u32[144,128]{1,0:T(1,128)}', space=vmem, size = 0x12000, scoped, tag = 'internal scratch']
  %s0 = inlined_call_operand.vmem [shape: bf16[512,8], index: 0, kind: input, shape index: {}]
  %s1 = inlined_call_operand.vmem [shape: bf16[512,32], index: 1, kind: input, shape index: {}]
  %s2 = inlined_call_operand.vmem [shape: bf16[40,128], index: 2, kind: input, shape index: {}]
  %s3 = inlined_call_operand.vmem [shape: f32[1,128], index: 3, kind: input, shape index: {}]
  %s4 = inlined_call_operand.hbm [shape: f32[512,128], index: 4, kind: output, shape index: {}]
  %s5 = sld [smem:[#allocation0]]
  $region49: #{tpu_custom_call.1} parent=0
    _
  %s7 = ssub.s32 1, %s5
  %s8 = scalar_select 0, %s7, %s5
  $region1: #{tpu_custom_call.1} parent=0
    #allocation2 [shape = 'u8[262144]{0}', space=vmem, size = 0x40000, scoped, tag = 'output window, operand 0']
    #allocation3 [shape = 's32[2]{0}', space=sflag, size = 0x8, scoped, tag = 'scoped memory for tpu_custom_call.1']
    %9 = vsyncpa [#allocation3], 0
    %s10 = scalar_lea.sflag [#allocation3], 1
    %11 = vsyncpa %s10, 0
    loop: start=0, step=1, limit=4
    $region2: #{tpu_custom_call.1} parent=1 // loop_pre_header
      _
    $region3: #{tpu_custom_call.1} parent=1 // loop_header
      %s13 = sphi 0, %s17
      %p14 = scmp.ge.s32.totalorder %s13, 4
      %s23 = sphi 0, %s25
      %s26 = sphi 0, %s23
      %s27 = sphi 0, %s26
      %s43 = sphi 0, %s27
      %s49 = sphi 0, %s51
      %s52 = sphi 0, %s49
      %s53 = sphi 0, %s52
      %s69 = sphi 0, %s53
      %s73 = sphi 0, %s73
      %s75 = sphi 0, %s73
      %s76 = sphi 0, %s75
      %s90 = sphi 0, %s76
      %s94 = sphi 0, %s94
      %s96 = sphi 0, %s94
      %s97 = sphi 0, %s96
      %s111 = sphi 0, %s97
      %s117 = sphi 0, %s119
      %s120 = sphi 0, %s117
      %s121 = sphi 0, %s120
      %s137 = sphi 0, %s121
    $region4: #{tpu_custom_call.1} parent=1 // loop_header_branch
      %16 = sbr.rel (%p14) target = $region8
    $region5: #{tpu_custom_call.1} parent=1 // loop_body
      %s18 = ssub.s32 %s13, 1
      %s19 = ssub.s32 %s13, 2
      %s20 = sadd.s32 %s13, 1
      %s21 = ssub.s32 %s13, %s20
      %p22 = scmp.eq.s32.totalorder %s21, 0
      %s24 = sadd.s32 %s23, 1
      %s25 = scalar_select %p22, %s23, %s24
      %p28 = pneg %p22
      %p29 = scmp.eq.s32.totalorder %s13, 1
      %p30 = por %p28, %p29
      %p31 = scmp.ne.s32.totalorder %s23, %s26
      %p32 = scmp.eq.s32.totalorder %s13, 0
      %p33 = por %p31, %p32
      %p34 = scmp.ne.s32.totalorder %s23, %s26
      %p35 = scmp.eq.s32.totalorder %s18, 1
      %p36 = por %p34, %p35
      %p37 = scmp.ne.s32.totalorder %s26, %s27
      %p38 = scmp.eq.s32.totalorder %s18, 0
      %p39 = por %p37, %p38
      %p40 = scmp.ne.s32.totalorder %s26, %s27
      %p41 = scmp.eq.s32.totalorder %s19, 1
      %p42 = por %p40, %p41
      %p44 = scmp.ne.s32.totalorder %s27, %s43
      %p45 = scmp.eq.s32.totalorder %s19, 0
      %p46 = por %p44, %p45
      %s47 = ssub.s32 %s13, %s20
      %p48 = scmp.eq.s32.totalorder %s47, 0
      %s50 = sadd.s32 %s49, 1
      %s51 = scalar_select %p48, %s49, %s50
      %p54 = pneg %p48
      %p55 = scmp.eq.s32.totalorder %s13, 1
      %p56 = por %p54, %p55
      %p57 = scmp.ne.s32.totalorder %s49, %s52
      %p58 = scmp.eq.s32.totalorder %s13, 0
      %p59 = por %p57, %p58
      %p60 = scmp.ne.s32.totalorder %s49, %s52
      %p61 = scmp.eq.s32.totalorder %s18, 1
      %p62 = por %p60, %p61
      %p63 = scmp.ne.s32.totalorder %s52, %s53
      %p64 = scmp.eq.s32.totalorder %s18, 0
      %p65 = por %p63, %p64
      %p66 = scmp.ne.s32.totalorder %s52, %s53
      %p67 = scmp.eq.s32.totalorder %s19, 1
      %p68 = por %p66, %p67
      %p70 = scmp.ne.s32.totalorder %s53, %s69
      %p71 = scmp.eq.s32.totalorder %s19, 0
      %p72 = por %p70, %p71
      %s74 = sadd.s32 %s73, 1
      %p77 = scmp.eq.s32.totalorder %s13, 1
      %p78 = scmp.ne.s32.totalorder %s73, %s75
      %p79 = scmp.eq.s32.totalorder %s13, 0
      %p80 = por %p78, %p79
      %p81 = scmp.ne.s32.totalorder %s73, %s75
      %p82 = scmp.eq.s32.totalorder %s18, 1
      %p83 = por %p81, %p82
      %p84 = scmp.ne.s32.totalorder %s75, %s76
      %p85 = scmp.eq.s32.totalorder %s18, 0
      %p86 = por %p84, %p85
      %p87 = scmp.ne.s32.totalorder %s75, %s76
      %p88 = scmp.eq.s32.totalorder %s19, 1
      %p89 = por %p87, %p88
      %p91 = scmp.ne.s32.totalorder %s76, %s90
      %p92 = scmp.eq.s32.totalorder %s19, 0
      %p93 = por %p91, %p92
      %s95 = sadd.s32 %s94, 1
      %p98 = scmp.eq.s32.totalorder %s13, 1
      %p99 = scmp.ne.s32.totalorder %s94, %s96
      %p100 = scmp.eq.s32.totalorder %s13, 0
      %p101 = por %p99, %p100
      %p102 = scmp.ne.s32.totalorder %s94, %s96
      %p103 = scmp.eq.s32.totalorder %s18, 1
      %p104 = por %p102, %p103
      %p105 = scmp.ne.s32.totalorder %s96, %s97
      %p106 = scmp.eq.s32.totalorder %s18, 0
      %p107 = por %p105, %p106
      %p108 = scmp.ne.s32.totalorder %s96, %s97
      %p109 = scmp.eq.s32.totalorder %s19, 1
      %p110 = por %p108, %p109
      %p112 = scmp.ne.s32.totalorder %s97, %s111
      %p113 = scmp.eq.s32.totalorder %s19, 0
      %p114 = por %p112, %p113
      %s115 = ssub.s32 %s13, %s20
      %p116 = scmp.eq.s32.totalorder %s115, 0
      %s118 = sadd.s32 %s117, 1
      %s119 = scalar_select %p116, %s117, %s118
      %p122 = pneg %p116
      %p123 = scmp.eq.s32.totalorder %s13, 1
      %p124 = por %p122, %p123
      %p125 = scmp.ne.s32.totalorder %s117, %s120
      %p126 = scmp.eq.s32.totalorder %s13, 0
      %p127 = por %p125, %p126
      %p128 = scmp.ne.s32.totalorder %s117, %s120
      %p129 = scmp.eq.s32.totalorder %s18, 1
      %p130 = por %p128, %p129
      %p131 = scmp.ne.s32.totalorder %s120, %s121
      %p132 = scmp.eq.s32.totalorder %s18, 0
      %p133 = por %p131, %p132
      %p134 = scmp.ne.s32.totalorder %s120, %s121
      %p135 = scmp.eq.s32.totalorder %s19, 1
      %p136 = por %p134, %p135
      %p138 = scmp.ne.s32.totalorder %s121, %s137
      %p139 = scmp.eq.s32.totalorder %s19, 0
      %p140 = por %p138, %p139
      %p141 = scmp.le.s32.totalorder 1, %s13
      %p142 = scmp.lt.s32.totalorder %s13, 3
      %p143 = pnand %p141, %p142
      %p144 = pneg %p143
      // Predicated region
      $region9: #{tpu_custom_call.1} parent=5 // pred_check
        _
      $region10: #{tpu_custom_call.1} parent=5 // pred_check_branch
        %146 = sbr.rel (%p143) target = $region12
      $region11: #{tpu_custom_call.1} parent=5 // pred_region
        %s147 = ssub.s32 %s13, 1
        // Predicated region
        $region13: #{tpu_custom_call.1} parent=11 // pred_check
          %p148 = pneg %p86
        $region14: #{tpu_custom_call.1} parent=11 // pred_check_branch
          %150 = sbr.rel (%p148) target = $region16
        $region15: #{tpu_custom_call.1} parent=11 // pred_region
          _
        $region16: #{tpu_custom_call.1} parent=11 // pred_fallthru
          _
        // Predicated region
        $region17: #{tpu_custom_call.1} parent=11 // pred_check
          %p151 = pneg %p107
        $region18: #{tpu_custom_call.1} parent=11 // pred_check_branch
          %153 = sbr.rel (%p151) target = $region20
        $region19: #{tpu_custom_call.1} parent=11 // pred_region
          _
        $region20: #{tpu_custom_call.1} parent=11 // pred_fallthru
          _
      $region12: #{tpu_custom_call.1} parent=5 // pred_fallthru
        _
      %p154 = scmp.lt.s32.totalorder %s13, 2
      // Predicated region
      $region21: #{tpu_custom_call.1} parent=5 // pred_check
        %p155 = pneg %p154
      $region22: #{tpu_custom_call.1} parent=5 // pred_check_branch
        %157 = sbr.rel (%p155) target = $region24
      $region23: #{tpu_custom_call.1} parent=5 // pred_region
        // Predicated region
        $region25: #{tpu_custom_call.1} parent=23 // pred_check
          %p158 = pneg %p33
        $region26: #{tpu_custom_call.1} parent=23 // pred_check_branch
          %160 = sbr.rel (%p158) target = $region28
        $region27: #{tpu_custom_call.1} parent=23 // pred_region
          %s161 = smul.u32 32, %s13
          %p162 = scmp.lt.s32.totalorder %s161, 63
          %s163 = scalar_select %p162, %s161, 63
          %s164 = smul.addr %s163, 4
          %s165 = scalar_lea.vmem %s0, %s164
          %s166 = smul.u32 32, %s13
        $region28: #{tpu_custom_call.1} parent=23 // pred_fallthru
          _
        // Predicated region
        $region29: #{tpu_custom_call.1} parent=23 // pred_check
          %p167 = pneg %p59
        $region30: #{tpu_custom_call.1} parent=23 // pred_check_branch
          %169 = sbr.rel (%p167) target = $region32
        $region31: #{tpu_custom_call.1} parent=23 // pred_region
          %s170 = smul.u32 32, %s13
          %p171 = scmp.lt.s32.totalorder %s170, 63
          %s172 = scalar_select %p171, %s170, 63
          %s173 = smul.addr %s172, 4
          %s174 = scalar_lea.vmem %s1, %s173
          %s175 = smul.u32 32, %s13
        $region32: #{tpu_custom_call.1} parent=23 // pred_fallthru
          _
      $region24: #{tpu_custom_call.1} parent=5 // pred_fallthru
        _
      %p176 = scmp.le.s32.totalorder 1, %s13
      %p177 = scmp.lt.s32.totalorder %s13, 3
      %p178 = pnand %p176, %p177
      %p179 = pneg %p178
      // Predicated region
      $region33: #{tpu_custom_call.1} parent=5 // pred_check
        _
      $region34: #{tpu_custom_call.1} parent=5 // pred_check_branch
        %181 = sbr.rel (%p178) target = $region36
      $region35: #{tpu_custom_call.1} parent=5 // pred_region
        %s182 = ssub.s32 %s13, 1
        %s183 = smul.u32 32, %s18
        %p184 = scmp.lt.s32.totalorder %s183, 63
        %s185 = scalar_select %p184, %s183, 63
        %s186 = smul.addr %s185, 4
        %s187 = scalar_lea.vmem %s0, %s186
        %p188 = pneg %p39
        %p189 = pneg %p36
        %s190 = smul.u32 32, %s18
        %p191 = scmp.lt.s32.totalorder %s190, 63
        %s192 = scalar_select %p191, %s190, 63
        %s193 = smul.addr %s192, 4
        %s194 = scalar_lea.vmem %s1, %s193
        %p195 = pneg %p65
        %p196 = pneg %p62
        %p197 = pneg %p86
        %p198 = pneg %p83
        %p199 = pneg %p107
        %p200 = pneg %p104
        %p201 = pneg %p133
        %p202 = pneg %p130
        %s203 = sand.u32 %s120, 1
        %s204 = scalar_lea.sflag [#allocation3], %s203
        %s205 = sand.u32 %s120, 1
        %s206 = smul.addr %s205, 256
        %s207 = scalar_lea.vmem [#allocation2], %s206
        %s208 = smul.u32 32, %s18
        %p209 = scmp.lt.s32.totalorder %s208, 63
        %s210 = scalar_select %p209, %s208, 63
        %s211 = smul.addr %s210, 4
        %s212 = scalar_lea.vmem %s0, %s211
        %s213 = smul.u32 32, %s18
        %s214 = smul.u32 32, %s18
        %p215 = scmp.lt.s32.totalorder %s214, 63
        %s216 = scalar_select %p215, %s214, 63
        %s217 = smul.addr %s216, 4
        %s218 = scalar_lea.vmem %s1, %s217
        %s219 = smul.u32 32, %s18
        %s220 = smul.u32 32, %s18
        %v222 = vld [vmem:[%s212] sm:$0xf]
        %v223 = vld [vmem:[%s212 + $0x4] sm:$0xf]
        %v224 = vld [vmem:[%s212 + $0x8] sm:$0xf]
        %v225 = vld [vmem:[%s212 + $0xc] sm:$0xf]
        %v226 = vld [vmem:[%s212 + $0x10] sm:$0xf]
        %v227 = vld [vmem:[%s212 + $0x14] sm:$0xf]
        %v228 = vld [vmem:[%s212 + $0x18] sm:$0xf]
        %v229 = vld [vmem:[%s212 + $0x1c] sm:$0xf]
        %v230 = vld [vmem:[%s212 + $0x20] sm:$0xf]
        %v231 = vld [vmem:[%s212 + $0x24] sm:$0xf]
        %v232 = vld [vmem:[%s212 + $0x28] sm:$0xf]
        %v233 = vld [vmem:[%s212 + $0x2c] sm:$0xf]
        %v234 = vld [vmem:[%s212 + $0x30] sm:$0xf]
        %v235 = vld [vmem:[%s212 + $0x34] sm:$0xf]
        %v236 = vld [vmem:[%s212 + $0x38] sm:$0xf]
        %v237 = vld [vmem:[%s212 + $0x3c] sm:$0xf]
        %v238 = vld [vmem:[%s212 + $0x40] sm:$0xf]
        %v239 = vld [vmem:[%s212 + $0x44] sm:$0xf]
        %v240 = vld [vmem:[%s212 + $0x48] sm:$0xf]
        %v241 = vld [vmem:[%s212 + $0x4c] sm:$0xf]
        %v242 = vld [vmem:[%s212 + $0x50] sm:$0xf]
        %v243 = vld [vmem:[%s212 + $0x54] sm:$0xf]
        %v244 = vld [vmem:[%s212 + $0x58] sm:$0xf]
        %v245 = vld [vmem:[%s212 + $0x5c] sm:$0xf]
        %v246 = vld [vmem:[%s212 + $0x60] sm:$0xf]
        %v247 = vld [vmem:[%s212 + $0x64] sm:$0xf]
        %v248 = vld [vmem:[%s212 + $0x68] sm:$0xf]
        %v249 = vld [vmem:[%s212 + $0x6c] sm:$0xf]
        %v250 = vld [vmem:[%s212 + $0x70] sm:$0xf]
        %v251 = vld [vmem:[%s212 + $0x74] sm:$0xf]
        %v252 = vld [vmem:[%s212 + $0x78] sm:$0xf]
        %v253 = vld [vmem:[%s212 + $0x7c] sm:$0xf]
        %v254 = vld [vmem:[%s218] sm:$0xf]
        %v255 = vld [vmem:[%s218 + $0x4] sm:$0xf]
        %v256 = vld [vmem:[%s218 + $0x8] sm:$0xf]
        %v257 = vld [vmem:[%s218 + $0xc] sm:$0xf]
        %v258 = vld [vmem:[%s218 + $0x10] sm:$0xf]
        %v259 = vld [vmem:[%s218 + $0x14] sm:$0xf]
        %v260 = vld [vmem:[%s218 + $0x18] sm:$0xf]
        %v261 = vld [vmem:[%s218 + $0x1c] sm:$0xf]
        %v262 = vld [vmem:[%s218 + $0x20] sm:$0xf]
        %v263 = vld [vmem:[%s218 + $0x24] sm:$0xf]
        %v264 = vld [vmem:[%s218 + $0x28] sm:$0xf]
        %v265 = vld [vmem:[%s218 + $0x2c] sm:$0xf]
        %v266 = vld [vmem:[%s218 + $0x30] sm:$0xf]
        %v267 = vld [vmem:[%s218 + $0x34] sm:$0xf]
        %v268 = vld [vmem:[%s218 + $0x38] sm:$0xf]
        %v269 = vld [vmem:[%s218 + $0x3c] sm:$0xf]
        %v270 = vld [vmem:[%s218 + $0x40] sm:$0xf]
        %v271 = vld [vmem:[%s218 + $0x44] sm:$0xf]
        %v272 = vld [vmem:[%s218 + $0x48] sm:$0xf]
        %v273 = vld [vmem:[%s218 + $0x4c] sm:$0xf]
        %v274 = vld [vmem:[%s218 + $0x50] sm:$0xf]
        %v275 = vld [vmem:[%s218 + $0x54] sm:$0xf]
        %v276 = vld [vmem:[%s218 + $0x58] sm:$0xf]
        %v277 = vld [vmem:[%s218 + $0x5c] sm:$0xf]
        %v278 = vld [vmem:[%s218 + $0x60] sm:$0xf]
        %v279 = vld [vmem:[%s218 + $0x64] sm:$0xf]
        %v280 = vld [vmem:[%s218 + $0x68] sm:$0xf]
        %v281 = vld [vmem:[%s218 + $0x6c] sm:$0xf]
        %v282 = vld [vmem:[%s218 + $0x70] sm:$0xf]
        %v283 = vld [vmem:[%s218 + $0x74] sm:$0xf]
        %v284 = vld [vmem:[%s218 + $0x78] sm:$0xf]
        %v285 = vld [vmem:[%s218 + $0x7c] sm:$0xf]
        %v318 = vunpack.c.l.b16 %v222
        %v319 = vunpack.c.l.b16 %v223
        %v320 = vunpack.c.l.b16 %v224
        %v321 = vunpack.c.l.b16 %v225
        %v322 = vunpack.c.l.b16 %v226
        %v323 = vunpack.c.l.b16 %v227
        %v324 = vunpack.c.l.b16 %v228
        %v325 = vunpack.c.l.b16 %v229
        %v326 = vunpack.c.l.b16 %v230
        %v327 = vunpack.c.l.b16 %v231
        %v328 = vunpack.c.l.b16 %v232
        %v329 = vunpack.c.l.b16 %v233
        %v330 = vunpack.c.l.b16 %v234
        %v331 = vunpack.c.l.b16 %v235
        %v332 = vunpack.c.l.b16 %v236
        %v333 = vunpack.c.l.b16 %v237
        %v334 = vunpack.c.l.b16 %v238
        %v335 = vunpack.c.l.b16 %v239
        %v336 = vunpack.c.l.b16 %v240
        %v337 = vunpack.c.l.b16 %v241
        %v338 = vunpack.c.l.b16 %v242
        %v339 = vunpack.c.l.b16 %v243
        %v340 = vunpack.c.l.b16 %v244
        %v341 = vunpack.c.l.b16 %v245
        %v342 = vunpack.c.l.b16 %v246
        %v343 = vunpack.c.l.b16 %v247
        %v344 = vunpack.c.l.b16 %v248
        %v345 = vunpack.c.l.b16 %v249
        %v346 = vunpack.c.l.b16 %v250
        %v347 = vunpack.c.l.b16 %v251
        %v348 = vunpack.c.l.b16 %v252
        %v349 = vunpack.c.l.b16 %v253
        %v350 = vpack.c.b16 %v319, %v318
        %v351 = vpack.c.b16 %v321, %v320
        %v352 = vpack.c.b16 %v323, %v322
        %v353 = vpack.c.b16 %v325, %v324
        %v354 = vpack.c.b16 %v327, %v326
        %v355 = vpack.c.b16 %v329, %v328
        %v356 = vpack.c.b16 %v331, %v330
        %v357 = vpack.c.b16 %v333, %v332
        %v358 = vpack.c.b16 %v335, %v334
        %v359 = vpack.c.b16 %v337, %v336
        %v360 = vpack.c.b16 %v339, %v338
        %v361 = vpack.c.b16 %v341, %v340
        %v362 = vpack.c.b16 %v343, %v342
        %v363 = vpack.c.b16 %v345, %v344
        %v364 = vpack.c.b16 %v347, %v346
        %v365 = vpack.c.b16 %v349, %v348
        %v398 = vunpack.c.l.b16 %v254
        %v399 = vunpack.c.l.b16 %v255
        %v400 = vunpack.c.l.b16 %v256
        %v401 = vunpack.c.l.b16 %v257
        %v402 = vunpack.c.l.b16 %v258
        %v403 = vunpack.c.l.b16 %v259
        %v404 = vunpack.c.l.b16 %v260
        %v405 = vunpack.c.l.b16 %v261
        %v406 = vunpack.c.l.b16 %v262
        %v407 = vunpack.c.l.b16 %v263
        %v408 = vunpack.c.l.b16 %v264
        %v409 = vunpack.c.l.b16 %v265
        %v410 = vunpack.c.l.b16 %v266
        %v411 = vunpack.c.l.b16 %v267
        %v412 = vunpack.c.l.b16 %v268
        %v413 = vunpack.c.l.b16 %v269
        %v414 = vunpack.c.l.b16 %v270
        %v415 = vunpack.c.l.b16 %v271
        %v416 = vunpack.c.l.b16 %v272
        %v417 = vunpack.c.l.b16 %v273
        %v418 = vunpack.c.l.b16 %v274
        %v419 = vunpack.c.l.b16 %v275
        %v420 = vunpack.c.l.b16 %v276
        %v421 = vunpack.c.l.b16 %v277
        %v422 = vunpack.c.l.b16 %v278
        %v423 = vunpack.c.l.b16 %v279
        %v424 = vunpack.c.l.b16 %v280
        %v425 = vunpack.c.l.b16 %v281
        %v426 = vunpack.c.l.b16 %v282
        %v427 = vunpack.c.l.b16 %v283
        %v428 = vunpack.c.l.b16 %v284
        %v429 = vunpack.c.l.b16 %v285
        %v430 = vpack.c.b16 %v399, %v398
        %v431 = vpack.c.b16 %v401, %v400
        %v432 = vpack.c.b16 %v403, %v402
        %v433 = vpack.c.b16 %v405, %v404
        %v434 = vpack.c.b16 %v407, %v406
        %v435 = vpack.c.b16 %v409, %v408
        %v436 = vpack.c.b16 %v411, %v410
        %v437 = vpack.c.b16 %v413, %v412
        %v438 = vpack.c.b16 %v415, %v414
        %v439 = vpack.c.b16 %v417, %v416
        %v440 = vpack.c.b16 %v419, %v418
        %v441 = vpack.c.b16 %v421, %v420
        %v442 = vpack.c.b16 %v423, %v422
        %v443 = vpack.c.b16 %v425, %v424
        %v444 = vpack.c.b16 %v427, %v426
        %v445 = vpack.c.b16 %v429, %v428
        %446 = vrot.lane.b32.xlu0 %v430, 8
        %v447 = vpop.permute.xlu0 %446
        %448 = vrot.lane.b32.xlu0 %v431, 8
        %v449 = vpop.permute.xlu0 %448
        %450 = vrot.lane.b32.xlu0 %v432, 8
        %v451 = vpop.permute.xlu0 %450
        %452 = vrot.lane.b32.xlu0 %v433, 8
        %v453 = vpop.permute.xlu0 %452
        %454 = vrot.lane.b32.xlu0 %v434, 8
        %v455 = vpop.permute.xlu0 %454
        %456 = vrot.lane.b32.xlu0 %v435, 8
        %v457 = vpop.permute.xlu0 %456
        %458 = vrot.lane.b32.xlu0 %v436, 8
        %v459 = vpop.permute.xlu0 %458
        %460 = vrot.lane.b32.xlu0 %v437, 8
        %v461 = vpop.permute.xlu0 %460
        %462 = vrot.lane.b32.xlu0 %v438, 8
        %v463 = vpop.permute.xlu0 %462
        %464 = vrot.lane.b32.xlu0 %v439, 8
        %v465 = vpop.permute.xlu0 %464
        %466 = vrot.lane.b32.xlu0 %v440, 8
        %v467 = vpop.permute.xlu0 %466
        %468 = vrot.lane.b32.xlu0 %v441, 8
        %v469 = vpop.permute.xlu0 %468
        %470 = vrot.lane.b32.xlu0 %v442, 8
        %v471 = vpop.permute.xlu0 %470
        %472 = vrot.lane.b32.xlu0 %v443, 8
        %v473 = vpop.permute.xlu0 %472
        %474 = vrot.lane.b32.xlu0 %v444, 8
        %v475 = vpop.permute.xlu0 %474
        %476 = vrot.lane.b32.xlu0 %v445, 8
        %v477 = vpop.permute.xlu0 %476
        %vm478 = vcmask 64512
        %v481 = vsel %vm478, %v350, %v447
        %v484 = vsel %vm478, %v351, %v449
        %v487 = vsel %vm478, %v352, %v451
        %v490 = vsel %vm478, %v353, %v453
        %v493 = vsel %vm478, %v354, %v455
        %v496 = vsel %vm478, %v355, %v457
        %v499 = vsel %vm478, %v356, %v459
        %v502 = vsel %vm478, %v357, %v461
        %v505 = vsel %vm478, %v358, %v463
        %v508 = vsel %vm478, %v359, %v465
        %v511 = vsel %vm478, %v360, %v467
        %v514 = vsel %vm478, %v361, %v469
        %v517 = vsel %vm478, %v362, %v471
        %v520 = vsel %vm478, %v363, %v473
        %v523 = vsel %vm478, %v364, %v475
        %v526 = vsel %vm478, %v365, %v477
        %v527 = vld [vmem:[%s2] sm:$0xf]
        %v528 = vld [vmem:[%s2 + $0x4] sm:$0xf]
        %v529 = vld [vmem:[%s2 + $0x8] sm:$0xf]
        %v530 = vld [vmem:[%s2 + $0xc] sm:$0xf]
        %v531 = vld [vmem:[%s2 + $0x10] sm:$0xf]
        %v532 = vld [vmem:[%s3] sm:$0x1]
        %v534 = vlaneseq
        %v535 = vshrl.u32 %v534, 7
        %v536 = vsub.s32 0, %v535
        %v537 = vrot.slane %v532, %v536
        %v544 = vunpack.c.l.b16 %v527
        %v545 = vunpack.c.l.b16 %v528
        %v546 = vunpack.c.l.b16 %v529
        %v547 = vunpack.c.l.b16 %v530
        %v548 = vunpack.c.l.b16 %v531
        %v549 = vpack.c.b16 %v545, %v544
        %v550 = vpack.c.b16 %v547, %v546
        %v551 = vpack.c.b16 %v548, %v548
        %vm554 = vcmask 326656
        %v555 = vsel %vm554, %v481, 0
        %v557 = vsel %vm554, %v484, 0
        %v559 = vsel %vm554, %v487, 0
        %v561 = vsel %vm554, %v490, 0
        %v563 = vsel %vm554, %v493, 0
        %v565 = vsel %vm554, %v496, 0
        %v567 = vsel %vm554, %v499, 0
        %v569 = vsel %vm554, %v502, 0
        %v571 = vsel %vm554, %v505, 0
        %v573 = vsel %vm554, %v508, 0
        %v575 = vsel %vm554, %v511, 0
        %v577 = vsel %vm554, %v514, 0
        %v579 = vsel %vm554, %v517, 0
        %v581 = vsel %vm554, %v520, 0
        %v583 = vsel %vm554, %v523, 0
        %v585 = vsel %vm554, %v526, 0
        %vm587 = vcmask 1043456
        %v589 = vsel %vm587, %v551, 0
        %591 = vmatprep.subr.bf16.mxu0 0
        %592 = vmatpush1.bf16.msra.mxu0 %v549
        %593 = vmatprep.subr.bf16.mxu0 0
        %594 = vmatpush1.bf16.msra.mxu0 %v550
        %595 = vmatprep.subr.bf16.mxu0 0
        %596 = vmatpush1.bf16.msra.mxu0 %v589
        %597 = vmatprep.subr.bf16.mxu0 0
        %598 = vmatpush1.bf16.msra.mxu0 0
        %599 = vmatprep.subr.bf16.mxu0 0
        %600 = vmatpush1.bf16.msra.mxu0 0
        %601 = vmatprep.subr.bf16.mxu0 0
        %602 = vmatpush1.bf16.msra.mxu0 0
        %603 = vmatprep.subr.bf16.mxu0 0
        %604 = vmatpush1.bf16.msra.mxu0 0
        %605 = vmatprep.subr.bf16.mxu0 0
        %606 = vmatpush1.bf16.msra.mxu0 0
        %607 = vmatprep.subr.bf16.mxu0 0
        %608 = vmatpush1.bf16.msra.mxu0 0
        %609 = vmatprep.subr.bf16.mxu0 0
        %610 = vmatpush1.bf16.msra.mxu0 0
        %611 = vmatprep.subr.bf16.mxu0 0
        %612 = vmatpush1.bf16.msra.mxu0 0
        %613 = vmatprep.subr.bf16.mxu0 0
        %614 = vmatpush1.bf16.msra.mxu0 0
        %615 = vmatprep.subr.bf16.mxu0 0
        %616 = vmatpush1.bf16.msra.mxu0 0
        %617 = vmatprep.subr.bf16.mxu0 0
        %618 = vmatpush1.bf16.msra.mxu0 0
        %619 = vmatprep.subr.bf16.mxu0 0
        %620 = vmatpush1.bf16.msra.mxu0 0
        %621 = vmatprep.subr.bf16.mxu0 0
        %622 = vmatpush1.bf16.msra.mxu0 0
        %623 = vmatprep.mubr.bf16.mxu0 0
        %624 = vmatmul.mubr.bf16.gmra.mrb[0].mxu0 %v555
        %v625 = vpop.f32.mrb[0].mxu0
        %v626 = vadd.f32 %v537, %v625
        %v627 = vpop.f32.mrb[0].mxu0
        %v628 = vpop.f32.mrb[0].mxu0
        %v629 = vadd.f32 %v537, %v628
        %v630 = vpop.f32.mrb[0].mxu0
        %631 = vmatprep.mubr.bf16.mxu0 0
        %632 = vmatmul.mubr.bf16.gmra.mrb[0].mxu0 %v557
        %v633 = vpop.f32.mrb[0].mxu0
        %v634 = vadd.f32 %v537, %v633
        %v635 = vpop.f32.mrb[0].mxu0
        %v636 = vpop.f32.mrb[0].mxu0
        %v637 = vadd.f32 %v537, %v636
        %v638 = vpop.f32.mrb[0].mxu0
        %639 = vmatprep.mubr.bf16.mxu0 0
        %640 = vmatmul.mubr.bf16.gmra.mrb[0].mxu0 %v559
        %v641 = vpop.f32.mrb[0].mxu0
        %v642 = vadd.f32 %v537, %v641
        %v643 = vpop.f32.mrb[0].mxu0
        %v644 = vpop.f32.mrb[0].mxu0
        %v645 = vadd.f32 %v537, %v644
        %v646 = vpop.f32.mrb[0].mxu0
        %647 = vmatprep.mubr.bf16.mxu0 0
        %648 = vmatmul.mubr.bf16.gmra.mrb[0].mxu0 %v561
        %v649 = vpop.f32.mrb[0].mxu0
        %v650 = vadd.f32 %v537, %v649
        %v651 = vpop.f32.mrb[0].mxu0
        %v652 = vpop.f32.mrb[0].mxu0
        %v653 = vadd.f32 %v537, %v652
        %v654 = vpop.f32.mrb[0].mxu0
        %655 = vmatprep.mubr.bf16.mxu0 0
        %656 = vmatmul.mubr.bf16.gmra.mrb[0].mxu0 %v563
        %v657 = vpop.f32.mrb[0].mxu0
        %v658 = vadd.f32 %v537, %v657
        %v659 = vpop.f32.mrb[0].mxu0
        %v660 = vpop.f32.mrb[0].mxu0
        %v661 = vadd.f32 %v537, %v660
        %v662 = vpop.f32.mrb[0].mxu0
        %663 = vmatprep.mubr.bf16.mxu0 0
        %664 = vmatmul.mubr.bf16.gmra.mrb[0].mxu0 %v565
        %v665 = vpop.f32.mrb[0].mxu0
        %v666 = vadd.f32 %v537, %v665
        %v667 = vpop.f32.mrb[0].mxu0
        %v668 = vpop.f32.mrb[0].mxu0
        %v669 = vadd.f32 %v537, %v668
        %v670 = vpop.f32.mrb[0].mxu0
        %671 = vmatprep.mubr.bf16.mxu0 0
        %672 = vmatmul.mubr.bf16.gmra.mrb[0].mxu0 %v567
        %v673 = vpop.f32.mrb[0].mxu0
        %v674 = vadd.f32 %v537, %v673
        %v675 = vpop.f32.mrb[0].mxu0
        %v676 = vpop.f32.mrb[0].mxu0
        %v677 = vadd.f32 %v537, %v676
        %v678 = vpop.f32.mrb[0].mxu0
        %679 = vmatprep.mubr.bf16.mxu0 0
        %680 = vmatmul.mubr.bf16.gmra.mrb[0].mxu0 %v569
        %v681 = vpop.f32.mrb[0].mxu0
        %v682 = vadd.f32 %v537, %v681
        %v683 = vpop.f32.mrb[0].mxu0
        %v684 = vpop.f32.mrb[0].mxu0
        %v685 = vadd.f32 %v537, %v684
        %v686 = vpop.f32.mrb[0].mxu0
        %687 = vmatprep.mubr.bf16.mxu0 0
        %688 = vmatmul.mubr.bf16.gmra.mrb[0].mxu0 %v571
        %v689 = vpop.f32.mrb[0].mxu0
        %v690 = vadd.f32 %v537, %v689
        %v691 = vpop.f32.mrb[0].mxu0
        %v692 = vpop.f32.mrb[0].mxu0
        %v693 = vadd.f32 %v537, %v692
        %v694 = vpop.f32.mrb[0].mxu0
        %695 = vmatprep.mubr.bf16.mxu0 0
        %696 = vmatmul.mubr.bf16.gmra.mrb[0].mxu0 %v573
        %v697 = vpop.f32.mrb[0].mxu0
        %v698 = vadd.f32 %v537, %v697
        %v699 = vpop.f32.mrb[0].mxu0
        %v700 = vpop.f32.mrb[0].mxu0
        %v701 = vadd.f32 %v537, %v700
        %v702 = vpop.f32.mrb[0].mxu0
        %703 = vmatprep.mubr.bf16.mxu0 0
        %704 = vmatmul.mubr.bf16.gmra.mrb[0].mxu0 %v575
        %v705 = vpop.f32.mrb[0].mxu0
        %v706 = vadd.f32 %v537, %v705
        %v707 = vpop.f32.mrb[0].mxu0
        %v708 = vpop.f32.mrb[0].mxu0
        %v709 = vadd.f32 %v537, %v708
        %v710 = vpop.f32.mrb[0].mxu0
        %711 = vmatprep.mubr.bf16.mxu0 0
        %712 = vmatmul.mubr.bf16.gmra.mrb[0].mxu0 %v577
        %v713 = vpop.f32.mrb[0].mxu0
        %v714 = vadd.f32 %v537, %v713
        %v715 = vpop.f32.mrb[0].mxu0
        %v716 = vpop.f32.mrb[0].mxu0
        %v717 = vadd.f32 %v537, %v716
        %v718 = vpop.f32.mrb[0].mxu0
        %719 = vmatprep.mubr.bf16.mxu0 0
        %720 = vmatmul.mubr.bf16.gmra.mrb[0].mxu0 %v579
        %v721 = vpop.f32.mrb[0].mxu0
        %v722 = vadd.f32 %v537, %v721
        %v723 = vpop.f32.mrb[0].mxu0
        %v724 = vpop.f32.mrb[0].mxu0
        %v725 = vadd.f32 %v537, %v724
        %v726 = vpop.f32.mrb[0].mxu0
        %727 = vmatprep.mubr.bf16.mxu0 0
        %728 = vmatmul.mubr.bf16.gmra.mrb[0].mxu0 %v581
        %v729 = vpop.f32.mrb[0].mxu0
        %v730 = vadd.f32 %v537, %v729
        %v731 = vpop.f32.mrb[0].mxu0
        %v732 = vpop.f32.mrb[0].mxu0
        %v733 = vadd.f32 %v537, %v732
        %v734 = vpop.f32.mrb[0].mxu0
        %735 = vmatprep.mubr.bf16.mxu0 0
        %736 = vmatmul.mubr.bf16.gmra.mrb[0].mxu0 %v583
        %v737 = vpop.f32.mrb[0].mxu0
        %v738 = vadd.f32 %v537, %v737
        %v739 = vpop.f32.mrb[0].mxu0
        %v740 = vpop.f32.mrb[0].mxu0
        %v741 = vadd.f32 %v537, %v740
        %v742 = vpop.f32.mrb[0].mxu0
        %743 = vmatprep.mubr.bf16.mxu0 0
        %744 = vmatmul.mubr.bf16.gmra.mrb[0].mxu0 %v585
        %v745 = vpop.f32.mrb[0].mxu0
        %v746 = vadd.f32 %v537, %v745
        %v747 = vpop.f32.mrb[0].mxu0
        %v748 = vpop.f32.mrb[0].mxu0
        %v749 = vadd.f32 %v537, %v748
        %v750 = vpop.f32.mrb[0].mxu0
        %751 = vdwg.mxu0
        %752 = vst [vmem:[%s207] sm:$0xff] %v626
        %753 = vst [vmem:[%s207 + $0x8] sm:$0xff] %v629
        %754 = vst [vmem:[%s207 + $0x10] sm:$0xff] %v634
        %755 = vst [vmem:[%s207 + $0x18] sm:$0xff] %v637
        %756 = vst [vmem:[%s207 + $0x20] sm:$0xff] %v642
        %757 = vst [vmem:[%s207 + $0x28] sm:$0xff] %v645
        %758 = vst [vmem:[%s207 + $0x30] sm:$0xff] %v650
        %759 = vst [vmem:[%s207 + $0x38] sm:$0xff] %v653
        %760 = vst [vmem:[%s207 + $0x40] sm:$0xff] %v658
        %761 = vst [vmem:[%s207 + $0x48] sm:$0xff] %v661
        %762 = vst [vmem:[%s207 + $0x50] sm:$0xff] %v666
        %763 = vst [vmem:[%s207 + $0x58] sm:$0xff] %v669
        %764 = vst [vmem:[%s207 + $0x60] sm:$0xff] %v674
        %765 = vst [vmem:[%s207 + $0x68] sm:$0xff] %v677
        %766 = vst [vmem:[%s207 + $0x70] sm:$0xff] %v682
        %767 = vst [vmem:[%s207 + $0x78] sm:$0xff] %v685
        %768 = vst [vmem:[%s207 + $0x80] sm:$0xff] %v690
        %769 = vst [vmem:[%s207 + $0x88] sm:$0xff] %v693
        %770 = vst [vmem:[%s207 + $0x90] sm:$0xff] %v698
        %771 = vst [vmem:[%s207 + $0x98] sm:$0xff] %v701
        %772 = vst [vmem:[%s207 + $0xa0] sm:$0xff] %v706
        %773 = vst [vmem:[%s207 + $0xa8] sm:$0xff] %v709
        %774 = vst [vmem:[%s207 + $0xb0] sm:$0xff] %v714
        %775 = vst [vmem:[%s207 + $0xb8] sm:$0xff] %v717
        %776 = vst [vmem:[%s207 + $0xc0] sm:$0xff] %v722
        %777 = vst [vmem:[%s207 + $0xc8] sm:$0xff] %v725
        %778 = vst [vmem:[%s207 + $0xd0] sm:$0xff] %v730
        %779 = vst [vmem:[%s207 + $0xd8] sm:$0xff] %v733
        %780 = vst [vmem:[%s207 + $0xe0] sm:$0xff] %v738
        %781 = vst [vmem:[%s207 + $0xe8] sm:$0xff] %v741
        %782 = vst [vmem:[%s207 + $0xf0] sm:$0xff] %v746
        %783 = vst [vmem:[%s207 + $0xf8] sm:$0xff] %v749
        %s784 = sand.u32 %s120, 1
        %s785 = scalar_lea.sflag [#allocation3], %s784
        %s786 = sand.u32 %s120, 1
        %s787 = smul.addr %s786, 256
        %s788 = scalar_lea.vmem [#allocation2], %s787
        // Predicated region
        $region37: #{tpu_custom_call.1} parent=35 // pred_check
          %p789 = pneg %p130
        $region38: #{tpu_custom_call.1} parent=35 // pred_check_branch
          %791 = sbr.rel (%p789) target = $region40
        $region39: #{tpu_custom_call.1} parent=35 // pred_region
          %s792 = smul.u32 32, %s18
          %s794 = ssub.s32 4096, 4096
          %795 = vsyncadd %s785, %s794
          %s796 = smul.addr %s792, 128
          %s797 = scalar_lea.hbm %s4, %s796
          %s798 = sshll.u32 %s788, 4
          %s799 = int_to_ptr.vmem [resolvable:$true] %s798
          %804 = dma.vmem_to_hbm [thread:$0]  %s799, 4096, %s797, %s785, 128, 128, 8
        $region40: #{tpu_custom_call.1} parent=35 // pred_fallthru
          _
      $region36: #{tpu_custom_call.1} parent=5 // pred_fallthru
        _
      %p805 = scmp.le.s32.totalorder 2, %s13
      // Predicated region
      $region41: #{tpu_custom_call.1} parent=5 // pred_check
        %p806 = pneg %p805
      $region42: #{tpu_custom_call.1} parent=5 // pred_check_branch
        %808 = sbr.rel (%p806) target = $region44
      $region43: #{tpu_custom_call.1} parent=5 // pred_region
        %s809 = ssub.s32 %s13, 2
        // Predicated region
        $region45: #{tpu_custom_call.1} parent=43 // pred_check
          %p810 = pneg %p136
        $region46: #{tpu_custom_call.1} parent=43 // pred_check_branch
          %812 = sbr.rel (%p810) target = $region48
        $region47: #{tpu_custom_call.1} parent=43 // pred_region
          %s813 = sand.u32 %s121, 1
          %s814 = scalar_lea.sflag [#allocation3], %s813
          %s815 = sand.u32 %s121, 1
          %s816 = smul.addr %s815, 256
          %s817 = scalar_lea.vmem [#allocation2], %s816
          %818 = dma.done %s814, 4096
        $region48: #{tpu_custom_call.1} parent=43 // pred_fallthru
          _
      $region44: #{tpu_custom_call.1} parent=5 // pred_fallthru
        _
    $region6: #{tpu_custom_call.1} parent=1 // loop_footer
      %s17 = sadd.s32 1, %s13
    $region7: #{tpu_custom_call.1} parent=1 // loop_footer_branch
      %12 = sbr.rel target = $region3
    $region8: #{tpu_custom_call.1} parent=1 // loop_exit
      _
    %819 = vsyncpa [#allocation3], 1
    %s820 = scalar_lea.sflag [#allocation3], 1
    %821 = vsyncpa %s820, 1

</llo_original>
